<compile_context>
chip_gen: v7x
topology: tpu7x:2x2x1
jax: 0.10.0
libtpu: 0.0.40
codegen_flags: <defaults>
</compile_context>

<pallas_src>
import functools

import numpy as np

import jax
import jax.numpy as jnp
from jax.experimental import pallas as pl
from jax.experimental.pallas import tpu as pltpu


def _round_up(x, m):
    return -(-x // m) * m


def _make_col_mask(K, H, W):
    """(K, Lpad) f32 mask for the flat-shift im2col.

    mask[dx, i] == 1.0 iff the element at flat (row-padded) position i is a
    legitimate in-row neighbour for column tap dx; 0.0 where a flat shift by
    (dy*W + dx) would wrap into the adjacent row (i.e. the left/right 'same'
    padding).  Row ('top/bottom') padding is handled by real zeros in the
    flat pad, so only the column mask is needed.
    """
    p = K // 2
    lead = p * W + p
    HW = H * W
    Lpad = HW + 2 * lead
    mask = np.zeros((K, Lpad), np.float32)
    w_in = np.arange(W)
    for dx in range(K):
        delta = dx - p
        valid = ((w_in - delta) >= 0) & ((w_in - delta) < W)
        mask[dx, lead:lead + HW] = np.tile(valid.astype(np.float32), H)
    return jnp.asarray(mask)


# ----------------------------------------------------------------------------
# Fused kernel: all heads, KxK conv + bias (+ReLU) then 1x1 conv + bias,
# channel-major end to end, for one image of the batch (grid over N).
#
# x_ref    : (Cin, H*W)            f32   flat NCHW feature map (one image)
# mask_ref : (K, Lpad)             f32   per-dx column-validity masks
# w3t_ref  : (Cmid_pad, K*K*Cin)   bf16  all heads' KxK weights, transposed
# b3_ref   : (Cmid_pad, 1)         f32
# w1t_ref  : (Cout_pad, Cmid_pad)  bf16  block-diagonal 1x1 weights, transposed
# b1_ref   : (Cout_pad, 1)         f32
# o_ref    : (Cout_pad, H*W)       f32   lane-dense, already NCHW
# ----------------------------------------------------------------------------
def _fused_heads_kernel(x_ref, mask_ref, w3t_ref, b3_ref, w1t_ref, b1_ref,
                        o_ref, *, K, H, W, relu):
    Cin, HW = x_ref.shape
    p = K // 2
    lead = p * W + p

    # Row-padded flat map: one lane concat with zeros (no halo scratch, no
    # VMEM->VMEM copy, no ring zeroing).
    x = x_ref[...]                                            # (Cin, H*W)
    zpad = jnp.zeros((Cin, lead), x.dtype)
    xp = jnp.concatenate([zpad, x, zpad], axis=-1)            # (Cin, Lpad)

    # One pre-masked copy per column tap dx (reused across all dy): zeroes the
    # input columns whose flat-shifted read would wrap into the adjacent row.
    xm = [xp * mask_ref[dx:dx + 1, :] for dx in range(K)]

    # patches_t: (K*K*Cin, H*W), rows ordered (dy, dx, c).  Each tap slab is a
    # plain lane-offset slice; stacking is a SUBLANE concat of 8-aligned
    # chunks (no lane concat, no (H, W)->H*W reshape).
    slabs = []
    for dy in range(K):
        for dx in range(K):
            off = dy * W + dx
            slabs.append(xm[dx][:, off:off + HW])
    patches_t = jnp.concatenate(slabs, axis=0).astype(jnp.bfloat16)

    # Layer 1 (all heads at once): single deep channel-major MXU matmul,
    # f32 accumulation + bias + ReLU on full 128-lane tiles (Cmid padded).
    hidden_t = jnp.dot(w3t_ref[...], patches_t,
                       preferred_element_type=jnp.float32)    # (Cmid_pad, HW)
    hidden_t = hidden_t + b3_ref[...]
    if relu:
        hidden_t = jnp.maximum(hidden_t, 0.0)

    # Layer 2: block-diagonal 1x1 convs of all heads.  Output is lane-dense
    # (H*W on lanes) and already channel-major (NCHW) -- no transposes.
    out_t = jnp.dot(w1t_ref[...], hidden_t.astype(jnp.bfloat16),
                    preferred_element_type=jnp.float32)       # (Cout_pad, HW)
    o_ref[...] = (out_t + b1_ref[...]).astype(o_ref.dtype)


def fused_head_stack(x_nchw, w3t, b3, w1t, b1, *, K, relu):
    """Run the fused all-heads head stack. Returns (N, Cout_pad, H*W) f32."""
    N, Cin, H, W = x_nchw.shape
    HW = H * W
    Cmid_pad, KKC = w3t.shape
    Cout_pad = w1t.shape[0]
    p = K // 2
    Lpad = HW + 2 * (p * W + p)

    colmask = _make_col_mask(K, H, W)                 # compile-time constant
    # Free reshape: merges contiguous minor dims of the NCHW tensor.
    x_flat = x_nchw.reshape(N, Cin, HW).astype(jnp.float32)

    kernel = functools.partial(_fused_heads_kernel, K=K, H=H, W=W, relu=relu)
    return pl.pallas_call(
        kernel,
        out_shape=jax.ShapeDtypeStruct((N, Cout_pad, HW), jnp.float32),
        grid=(N,),
        in_specs=[
            pl.BlockSpec((None, Cin, HW), lambda n: (n, 0, 0)),
            pl.BlockSpec((K, Lpad), lambda n: (0, 0)),
            pl.BlockSpec((Cmid_pad, KKC), lambda n: (0, 0)),
            pl.BlockSpec((Cmid_pad, 1), lambda n: (0, 0)),
            pl.BlockSpec((Cout_pad, Cmid_pad), lambda n: (0, 0)),
            pl.BlockSpec((Cout_pad, 1), lambda n: (0, 0)),
        ],
        out_specs=pl.BlockSpec((None, Cout_pad, HW), lambda n: (n, 0, 0)),
        compiler_params=pltpu.CompilerParams(
            dimension_semantics=("parallel",)),
    )(x_flat, colmask, w3t, b3, w1t, b1)


# ----------------------------------------------------------------------------
# BaseModel equivalent (parameters built deterministically in-script).
# ----------------------------------------------------------------------------
class BaseModelPallas:
    def __init__(self, heads, head_convs, num_stacks, last_channel,
                 actual_num_stacks, kernel_size, activations,
                 head_conv_value, prior_bias=-4.6, seed=0):
        # NOTE: `head_convs` is accepted but (as in the PyTorch module) the
        # per-head channel list is rebuilt from head_conv_value.
        # TODO(synk): the fused kernel covers the standard CenterTrack head
        # (one KxK intermediate conv + final 1x1); chains with
        # actual_num_stacks > 1 are not implemented here.
        assert actual_num_stacks == 1, "fused head kernel: one intermediate conv"
        assert kernel_size % 2 == 1, "only odd 'same' head kernels supported"

        self.num_stacks = num_stacks
        self.heads = dict(heads)
        self.K = kernel_size
        self.relu = bool(activations[0])
        self.params = {}   # per-head unpacked params (for reference checks)

        key = jax.random.PRNGKey(seed)
        Cin, Cmid = last_channel, head_conv_value

        per_head = {}
        for hi, head in enumerate(heads):
            classes = heads[head]
            kw = jax.random.fold_in(key, hi * 100)
            w3 = 0.1 * jax.random.normal(
                kw, (kernel_size, kernel_size, Cin, Cmid), jnp.float32)
            if 'hm' in head:
                # fill_fc_weights is NOT applied to 'hm' heads: deterministic
                # nonzero bias standing in for torch's default init.
                b3 = 0.01 * jax.random.normal(
                    jax.random.fold_in(kw, 1), (Cmid,), jnp.float32)
            else:
                b3 = jnp.zeros((Cmid,), jnp.float32)          # fill_fc_weights
            kw2 = jax.random.fold_in(key, hi * 100 + 99)
            w1 = 0.1 * jax.random.normal(kw2, (Cmid, classes), jnp.float32)
            if 'hm' in head:
                b1 = jnp.full((classes,), prior_bias, jnp.float32)
            else:
                b1 = jnp.zeros((classes,), jnp.float32)        # fill_fc_weights
            per_head[head] = (w3, b3, w1, b1)
            self.params[head] = per_head[head]

        # ---- pack all heads into one fused, transposed parameter set --------
        n_heads = len(heads)
        Cmid_total = Cmid * n_heads
        Cmid_pad = _round_up(Cmid_total, 128)   # full-lane hidden slab
        Cout_total = sum(heads[h] for h in heads)
        Cout_pad = _round_up(Cout_total, 8)     # sublane-pad output slab
        KKC = kernel_size * kernel_size * Cin

        w3t = jnp.zeros((Cmid_pad, KKC), jnp.float32)
        b3c = jnp.zeros((Cmid_pad,), jnp.float32)
        w1t = jnp.zeros((Cout_pad, Cmid_pad), jnp.float32)
        b1c = jnp.zeros((Cout_pad,), jnp.float32)
        self.head_slices = {}
        off = 0
        for hi, h in enumerate(heads):
            cls = heads[h]
            w3_h, b3_h, w1_h, b1_h = per_head[h]
            w3t = w3t.at[hi * Cmid:(hi + 1) * Cmid, :].set(
                w3_h.reshape(KKC, Cmid).T)
            b3c = b3c.at[hi * Cmid:(hi + 1) * Cmid].set(b3_h)
            w1t = w1t.at[off:off + cls, hi * Cmid:(hi + 1) * Cmid].set(w1_h.T)
            b1c = b1c.at[off:off + cls].set(b1_h)
            self.head_slices[h] = (off, cls)
            off += cls

        self.w3t = w3t.astype(jnp.bfloat16)            # (Cmid_pad, K*K*Cin)
        self.b3 = b3c.reshape(Cmid_pad, 1)
        self.w1t = w1t.astype(jnp.bfloat16)            # (Cout_pad, Cmid_pad)
        self.b1 = b1c.reshape(Cout_pad, 1)

        self._jit_forward = jax.jit(self._forward_impl)

    def img2feats(self, x_nchw):
        # TODO(synk): img2feats is abstract in BaseModel (backbone lives in
        # subclasses); identity stub producing `num_stacks` feature maps.
        return [x_nchw for _ in range(self.num_stacks)]

    def _forward_impl(self, x_nchw):
        N, _, H, W = x_nchw.shape
        feats = self.img2feats(x_nchw.astype(jnp.float32))
        out = []
        for s in range(self.num_stacks):
            y = fused_head_stack(feats[s], self.w3t, self.b3, self.w1t,
                                 self.b1, K=self.K, relu=self.relu)
            z = {}
            for head, (off, cls) in self.head_slices.items():
                # y is already channel-major (NCHW): slice + free reshape only.
                z[head] = y[:, off:off + cls, :].reshape(N, cls, H, W)
            out.append(z)
        return out

    def forward(self, x_nchw, pre_img=None, pre_hm=None):
        # TODO(synk): pre_img / pre_hm path (imgpre2feats) is abstract in the
        # PyTorch module; routed through the same identity stub here.
        return self._jit_forward(x_nchw)


# ----------------------------------------------------------------------------
# Pure-JAX reference of the same (bf16-matmul) head pipeline, per head.
# ----------------------------------------------------------------------------
def _ref_head_stack(x_nchw, w3, b3, w1, b1, K, relu):
    x = jnp.transpose(x_nchw, (0, 2, 3, 1)).astype(jnp.float32)
    N, H, W, Cin = x.shape
    p = K // 2
    xp = jnp.pad(x, ((0, 0), (p, p), (p, p), (0, 0)))
    cols = [xp[:, dy:dy + H, dx:dx + W, :].reshape(N, H * W, Cin)
            for dy in range(K) for dx in range(K)]
    patches = jnp.concatenate(cols, axis=-1).astype(jnp.bfloat16)
    w3f = w3.reshape(K * K * Cin, -1).astype(jnp.bfloat16)
    hidden = jnp.einsum('npk,km->npm', patches, w3f,
                        preferred_element_type=jnp.float32) + b3
    if relu:
        hidden = jnp.maximum(hidden, 0.0)
    out = jnp.einsum('npm,mc->npc', hidden.astype(jnp.bfloat16),
                     w1.astype(jnp.bfloat16),
                     preferred_element_type=jnp.float32) + b1
    return jnp.transpose(out, (0, 2, 1)).reshape(N, -1, H, W)


if __name__ == "__main__":
    heads = {"hm": 3, "reg": 2, "wh": 2}
    head_convs = {h: 32 for h in heads}
    num_stacks = 1
    last_channel = 16
    actual_num_stacks = 1
    kernel_size = 3
    activations = [True]
    head_conv_value = 32

    model = BaseModelPallas(
        heads, head_convs, num_stacks, last_channel, actual_num_stacks,
        kernel_size, activations, head_conv_value, prior_bias=-4.6, seed=0)

    key = jax.random.PRNGKey(0)
    N, C, H, W = 2, last_channel, 16, 16
    x = jax.random.normal(key, (N, C, H, W), jnp.float32)

    out = model.forward(x)
    jax.tree_util.tree_map(jax.block_until_ready, out)

    ok = True
    for s in range(num_stacks):
        for head in heads:
            w3, b3, w1, b1 = model.params[head]
            ref = _ref_head_stack(x, w3, b3, w1, b1, kernel_size,
                                  bool(activations[0]))
            got = out[s][head]
            if got.shape != (N, heads[head], H, W):
                ok = False
            if not jnp.allclose(got, ref, atol=1e-2, rtol=1e-2):
                ok = False

    print("KERNEL_OK" if ok else "MISMATCH")
</pallas_src>

<mosaic_0001>
module attributes {stable_mosaic.version = 11 : i64} {
  func.func @_fused_heads_kernel(%arg0: i32, %arg1: memref<1x16x256xf32, #tpu.memory_space<vmem>>, %arg2: memref<3x290xf32, #tpu.memory_space<vmem>>, %arg3: memref<128x144xbf16, #tpu.memory_space<vmem>>, %arg4: memref<128x1xf32, #tpu.memory_space<vmem>>, %arg5: memref<8x128xbf16, #tpu.memory_space<vmem>>, %arg6: memref<8x1xf32, #tpu.memory_space<vmem>>, %arg7: memref<1x8x256xf32, #tpu.memory_space<vmem>>) attributes {dimension_semantics = [#tpu.dimension_semantics<parallel>], iteration_bounds = array<i64: 2>, scalar_prefetch = 0 : i64, scratch_operands = 0 : i64, tpu.core_type = #tpu.core_type<tc>, window_params = [{transform_indices = @transform_0, window_bounds = array<i64: 1, 16, 256>}, {pipeline_mode = #tpu.pipeline_mode<synchronous>, transform_indices = @transform_1, window_bounds = array<i64: 3, 290>}, {pipeline_mode = #tpu.pipeline_mode<synchronous>, transform_indices = @transform_2, window_bounds = array<i64: 128, 144>}, {pipeline_mode = #tpu.pipeline_mode<synchronous>, transform_indices = @transform_3, window_bounds = array<i64: 128, 1>}, {pipeline_mode = #tpu.pipeline_mode<synchronous>, transform_indices = @transform_4, window_bounds = array<i64: 8, 128>}, {pipeline_mode = #tpu.pipeline_mode<synchronous>, transform_indices = @transform_5, window_bounds = array<i64: 8, 1>}, {transform_indices = @transform_6, window_bounds = array<i64: 1, 8, 256>}]} {
    %c0 = arith.constant 0 : index
    %c0_0 = arith.constant 0 : index
    %c0_1 = arith.constant 0 : index
    %0 = vector.load %arg1[%c0, %c0_0, %c0_1] : memref<1x16x256xf32, #tpu.memory_space<vmem>>, vector<1x16x256xf32>
    %1 = vector.shape_cast %0 : vector<1x16x256xf32> to vector<16x256xf32>
    %cst = arith.constant 0.000000e+00 : f32
    %2 = vector.broadcast %cst : f32 to vector<16x17xf32>
    %3 = tpu.concatenate %2, %1, %2 in 1 : vector<16x17xf32>, vector<16x256xf32>, vector<16x17xf32> -> vector<16x290xf32>
    %c0_2 = arith.constant 0 : index
    %c0_3 = arith.constant 0 : index
    %4 = vector.load %arg2[%c0_2, %c0_3] : memref<3x290xf32, #tpu.memory_space<vmem>>, vector<1x290xf32>
    %5 = vector.broadcast %4 : vector<1x290xf32> to vector<16x290xf32>
    %6 = arith.mulf %3, %5 : vector<16x290xf32>
    %c1 = arith.constant 1 : index
    %c0_4 = arith.constant 0 : index
    %7 = vector.load %arg2[%c1, %c0_4] : memref<3x290xf32, #tpu.memory_space<vmem>>, vector<1x290xf32>
    %8 = vector.broadcast %7 : vector<1x290xf32> to vector<16x290xf32>
    %9 = arith.mulf %3, %8 : vector<16x290xf32>
    %c2 = arith.constant 2 : index
    %c0_5 = arith.constant 0 : index
    %10 = vector.load %arg2[%c2, %c0_5] : memref<3x290xf32, #tpu.memory_space<vmem>>, vector<1x290xf32>
    %11 = vector.broadcast %10 : vector<1x290xf32> to vector<16x290xf32>
    %12 = arith.mulf %3, %11 : vector<16x290xf32>
    %13 = vector.extract_strided_slice %6 {offsets = [0, 0], sizes = [16, 256], strides = [1, 1]} : vector<16x290xf32> to vector<16x256xf32>
    %14 = vector.extract_strided_slice %9 {offsets = [0, 1], sizes = [16, 256], strides = [1, 1]} : vector<16x290xf32> to vector<16x256xf32>
    %15 = vector.extract_strided_slice %12 {offsets = [0, 2], sizes = [16, 256], strides = [1, 1]} : vector<16x290xf32> to vector<16x256xf32>
    %16 = vector.extract_strided_slice %6 {offsets = [0, 16], sizes = [16, 256], strides = [1, 1]} : vector<16x290xf32> to vector<16x256xf32>
    %17 = vector.extract_strided_slice %9 {offsets = [0, 17], sizes = [16, 256], strides = [1, 1]} : vector<16x290xf32> to vector<16x256xf32>
    %18 = vector.extract_strided_slice %12 {offsets = [0, 18], sizes = [16, 256], strides = [1, 1]} : vector<16x290xf32> to vector<16x256xf32>
    %19 = vector.extract_strided_slice %6 {offsets = [0, 32], sizes = [16, 256], strides = [1, 1]} : vector<16x290xf32> to vector<16x256xf32>
    %20 = vector.extract_strided_slice %9 {offsets = [0, 33], sizes = [16, 256], strides = [1, 1]} : vector<16x290xf32> to vector<16x256xf32>
    %21 = vector.extract_strided_slice %12 {offsets = [0, 34], sizes = [16, 256], strides = [1, 1]} : vector<16x290xf32> to vector<16x256xf32>
    %22 = tpu.concatenate %13, %14, %15, %16, %17, %18, %19, %20, %21 in 0 : vector<16x256xf32>, vector<16x256xf32>, vector<16x256xf32>, vector<16x256xf32>, vector<16x256xf32>, vector<16x256xf32>, vector<16x256xf32>, vector<16x256xf32>, vector<16x256xf32> -> vector<144x256xf32>
    %23 = arith.truncf %22 : vector<144x256xf32> to vector<144x256xbf16>
    %c0_6 = arith.constant 0 : index
    %c0_7 = arith.constant 0 : index
    %24 = vector.load %arg3[%c0_6, %c0_7] : memref<128x144xbf16, #tpu.memory_space<vmem>>, vector<128x144xbf16>
    %cst_8 = arith.constant dense<0.000000e+00> : vector<128x256xf32>
    %25 = tpu.matmul %24, %23, %cst_8 {dimension_numbers = #tpu.dot_dimension_numbers<[1], [0], [0], [1], [0, 0, 1, 1], [], []>} : vector<128x144xbf16>, vector<144x256xbf16>, vector<128x256xf32> -> vector<128x256xf32>
    %c0_9 = arith.constant 0 : index
    %c0_10 = arith.constant 0 : index
    %26 = vector.load %arg4[%c0_9, %c0_10] : memref<128x1xf32, #tpu.memory_space<vmem>>, vector<128x1xf32>
    %27 = vector.broadcast %26 : vector<128x1xf32> to vector<128x256xf32>
    %28 = arith.addf %25, %27 : vector<128x256xf32>
    %cst_11 = arith.constant 0.000000e+00 : f32
    %29 = vector.broadcast %cst_11 : f32 to vector<128x256xf32>
    %30 = arith.maximumf %28, %29 : vector<128x256xf32>
    %c0_12 = arith.constant 0 : index
    %c0_13 = arith.constant 0 : index
    %31 = vector.load %arg5[%c0_12, %c0_13] : memref<8x128xbf16, #tpu.memory_space<vmem>>, vector<8x128xbf16>
    %32 = arith.truncf %30 : vector<128x256xf32> to vector<128x256xbf16>
    %cst_14 = arith.constant dense<0.000000e+00> : vector<8x256xf32>
    %33 = tpu.matmul %31, %32, %cst_14 {dimension_numbers = #tpu.dot_dimension_numbers<[1], [0], [0], [1], [0, 0, 1, 1], [], []>} : vector<8x128xbf16>, vector<128x256xbf16>, vector<8x256xf32> -> vector<8x256xf32>
    %c0_15 = arith.constant 0 : index
    %c0_16 = arith.constant 0 : index
    %34 = vector.load %arg6[%c0_15, %c0_16] : memref<8x1xf32, #tpu.memory_space<vmem>>, vector<8x1xf32>
    %35 = vector.broadcast %34 : vector<8x1xf32> to vector<8x256xf32>
    %36 = arith.addf %33, %35 : vector<8x256xf32>
    %c0_17 = arith.constant 0 : index
    %c0_18 = arith.constant 0 : index
    %c0_19 = arith.constant 0 : index
    %37 = vector.load %arg7[%c0_17, %c0_18, %c0_19] : memref<1x8x256xf32, #tpu.memory_space<vmem>>, vector<1x8x256xf32>
    %38 = vector.shape_cast %37 : vector<1x8x256xf32> to vector<8x256xf32>
    %39 = vector.shape_cast %36 : vector<8x256xf32> to vector<1x8x256xf32>
    tpu.vector_store %arg7[%c0_17, %c0_18, %c0_19], %39 {strides = array<i32>} : memref<1x8x256xf32, #tpu.memory_space<vmem>>, vector<1x8x256xf32>,
    return
  }
  func.func @transform_0(%arg0: i32) -> (i32, i32, i32) {
    %c0_i32 = arith.constant 0 : i32
    %c0_i32_0 = arith.constant 0 : i32
    %c0_i32_1 = arith.constant 0 : i32
    return %arg0, %c0_i32, %c0_i32_0 : i32, i32, i32
  }
  func.func @transform_1(%arg0: i32) -> (i32, i32) {
    %c0_i32 = arith.constant 0 : i32
    %c0_i32_0 = arith.constant 0 : i32
    %c0_i32_1 = arith.constant 0 : i32
    return %c0_i32, %c0_i32_0 : i32, i32
  }
  func.func @transform_2(%arg0: i32) -> (i32, i32) {
    %c0_i32 = arith.constant 0 : i32
    %c0_i32_0 = arith.constant 0 : i32
    %c0_i32_1 = arith.constant 0 : i32
    return %c0_i32, %c0_i32_0 : i32, i32
  }
  func.func @transform_3(%arg0: i32) -> (i32, i32) {
    %c0_i32 = arith.constant 0 : i32
    %c0_i32_0 = arith.constant 0 : i32
    %c0_i32_1 = arith.constant 0 : i32
    return %c0_i32, %c0_i32_0 : i32, i32
  }
  func.func @transform_4(%arg0: i32) -> (i32, i32) {
    %c0_i32 = arith.constant 0 : i32
    %c0_i32_0 = arith.constant 0 : i32
    %c0_i32_1 = arith.constant 0 : i32
    return %c0_i32, %c0_i32_0 : i32, i32
  }
  func.func @transform_5(%arg0: i32) -> (i32, i32) {
    %c0_i32 = arith.constant 0 : i32
    %c0_i32_0 = arith.constant 0 : i32
    %c0_i32_1 = arith.constant 0 : i32
    return %c0_i32, %c0_i32_0 : i32, i32
  }
  func.func @transform_6(%arg0: i32) -> (i32, i32, i32) {
    %c0_i32 = arith.constant 0 : i32
    %c0_i32_0 = arith.constant 0 : i32
    %c0_i32_1 = arith.constant 0 : i32
    return %arg0, %c0_i32, %c0_i32_0 : i32, i32, i32
  }
}

</mosaic_0001>

<llo_original>
// kernel: _forward_impl.1
$region0: #{_forward_impl.1}
  #allocation0 [shape = 'u32[]', space=smem, size = 0x4, offset = 0x4, fixed_abs, tag = 'smem constant byte address 0x4 - core index']
  #allocation1 [shape = 'u32[144,128]{1,0:T(1,128)}', space=vmem, size = 0x12000, scoped, tag = 'internal scratch']
  %s0 = inlined_call_operand.vmem [shape: f32[2,16,256], index: 0, kind: input, shape index: {}]
  %s1 = inlined_call_operand.vmem [shape: f32[3,290], index: 1, kind: input, shape index: {}]
  %s2 = inlined_call_operand.vmem [shape: bf16[128,144], index: 2, kind: input, shape index: {}]
  %s3 = inlined_call_operand.vmem [shape: f32[128,1], index: 3, kind: input, shape index: {}]
  %s4 = inlined_call_operand.vmem [shape: bf16[8,128], index: 4, kind: input, shape index: {}]
  %s5 = inlined_call_operand.vmem [shape: f32[8,1], index: 5, kind: input, shape index: {}]
  %s6 = inlined_call_operand.vmem [shape: f32[2,8,256], index: 6, kind: output, shape index: {}]
  %s7 = sld [smem:[#allocation0]]
  $region57: #{_forward_impl.1} parent=0
    _
  %s9 = ssub.s32 1, %s7
  %s10 = scalar_select 0, %s9, %s7
  loop: start=0, step=1, limit=4
  $region2: #{_forward_impl.1} parent=0 // loop_pre_header
    _
  $region3: #{_forward_impl.1} parent=0 // loop_header
    %s12 = sphi 0, %s16
    %p13 = scmp.ge.s32.totalorder %s12, 4
    %s22 = sphi 0, %s24
    %s25 = sphi 0, %s22
    %s26 = sphi 0, %s25
    %s42 = sphi 0, %s26
    %s46 = sphi 0, %s46
    %s48 = sphi 0, %s46
    %s49 = sphi 0, %s48
    %s63 = sphi 0, %s49
    %s67 = sphi 0, %s67
    %s69 = sphi 0, %s67
    %s70 = sphi 0, %s69
    %s84 = sphi 0, %s70
    %s88 = sphi 0, %s88
    %s90 = sphi 0, %s88
    %s91 = sphi 0, %s90
    %s105 = sphi 0, %s91
    %s109 = sphi 0, %s109
    %s111 = sphi 0, %s109
    %s112 = sphi 0, %s111
    %s126 = sphi 0, %s112
    %s130 = sphi 0, %s130
    %s132 = sphi 0, %s130
    %s133 = sphi 0, %s132
    %s147 = sphi 0, %s133
    %s153 = sphi 0, %s155
    %s156 = sphi 0, %s153
    %s157 = sphi 0, %s156
    %s173 = sphi 0, %s157
  $region4: #{_forward_impl.1} parent=0 // loop_header_branch
    %15 = sbr.rel (%p13) target = $region8
  $region5: #{_forward_impl.1} parent=0 // loop_body
    %s17 = ssub.s32 %s12, 1
    %s18 = ssub.s32 %s12, 2
    %s19 = sadd.s32 %s12, 1
    %s20 = ssub.s32 %s12, %s19
    %p21 = scmp.eq.s32.totalorder %s20, 0
    %s23 = sadd.s32 %s22, 1
    %s24 = scalar_select %p21, %s22, %s23
    %p27 = pneg %p21
    %p28 = scmp.eq.s32.totalorder %s12, 1
    %p29 = por %p27, %p28
    %p30 = scmp.ne.s32.totalorder %s22, %s25
    %p31 = scmp.eq.s32.totalorder %s12, 0
    %p32 = por %p30, %p31
    %p33 = scmp.ne.s32.totalorder %s22, %s25
    %p34 = scmp.eq.s32.totalorder %s17, 1
    %p35 = por %p33, %p34
    %p36 = scmp.ne.s32.totalorder %s25, %s26
    %p37 = scmp.eq.s32.totalorder %s17, 0
    %p38 = por %p36, %p37
    %p39 = scmp.ne.s32.totalorder %s25, %s26
    %p40 = scmp.eq.s32.totalorder %s18, 1
    %p41 = por %p39, %p40
    %p43 = scmp.ne.s32.totalorder %s26, %s42
    %p44 = scmp.eq.s32.totalorder %s18, 0
    %p45 = por %p43, %p44
    %s47 = sadd.s32 %s46, 1
    %p50 = scmp.eq.s32.totalorder %s12, 1
    %p51 = scmp.ne.s32.totalorder %s46, %s48
    %p52 = scmp.eq.s32.totalorder %s12, 0
    %p53 = por %p51, %p52
    %p54 = scmp.ne.s32.totalorder %s46, %s48
    %p55 = scmp.eq.s32.totalorder %s17, 1
    %p56 = por %p54, %p55
    %p57 = scmp.ne.s32.totalorder %s48, %s49
    %p58 = scmp.eq.s32.totalorder %s17, 0
    %p59 = por %p57, %p58
    %p60 = scmp.ne.s32.totalorder %s48, %s49
    %p61 = scmp.eq.s32.totalorder %s18, 1
    %p62 = por %p60, %p61
    %p64 = scmp.ne.s32.totalorder %s49, %s63
    %p65 = scmp.eq.s32.totalorder %s18, 0
    %p66 = por %p64, %p65
    %s68 = sadd.s32 %s67, 1
    %p71 = scmp.eq.s32.totalorder %s12, 1
    %p72 = scmp.ne.s32.totalorder %s67, %s69
    %p73 = scmp.eq.s32.totalorder %s12, 0
    %p74 = por %p72, %p73
    %p75 = scmp.ne.s32.totalorder %s67, %s69
    %p76 = scmp.eq.s32.totalorder %s17, 1
    %p77 = por %p75, %p76
    %p78 = scmp.ne.s32.totalorder %s69, %s70
    %p79 = scmp.eq.s32.totalorder %s17, 0
    %p80 = por %p78, %p79
    %p81 = scmp.ne.s32.totalorder %s69, %s70
    %p82 = scmp.eq.s32.totalorder %s18, 1
    %p83 = por %p81, %p82
    %p85 = scmp.ne.s32.totalorder %s70, %s84
    %p86 = scmp.eq.s32.totalorder %s18, 0
    %p87 = por %p85, %p86
    %s89 = sadd.s32 %s88, 1
    %p92 = scmp.eq.s32.totalorder %s12, 1
    %p93 = scmp.ne.s32.totalorder %s88, %s90
    %p94 = scmp.eq.s32.totalorder %s12, 0
    %p95 = por %p93, %p94
    %p96 = scmp.ne.s32.totalorder %s88, %s90
    %p97 = scmp.eq.s32.totalorder %s17, 1
    %p98 = por %p96, %p97
    %p99 = scmp.ne.s32.totalorder %s90, %s91
    %p100 = scmp.eq.s32.totalorder %s17, 0
    %p101 = por %p99, %p100
    %p102 = scmp.ne.s32.totalorder %s90, %s91
    %p103 = scmp.eq.s32.totalorder %s18, 1
    %p104 = por %p102, %p103
    %p106 = scmp.ne.s32.totalorder %s91, %s105
    %p107 = scmp.eq.s32.totalorder %s18, 0
    %p108 = por %p106, %p107
    %s110 = sadd.s32 %s109, 1
    %p113 = scmp.eq.s32.totalorder %s12, 1
    %p114 = scmp.ne.s32.totalorder %s109, %s111
    %p115 = scmp.eq.s32.totalorder %s12, 0
    %p116 = por %p114, %p115
    %p117 = scmp.ne.s32.totalorder %s109, %s111
    %p118 = scmp.eq.s32.totalorder %s17, 1
    %p119 = por %p117, %p118
    %p120 = scmp.ne.s32.totalorder %s111, %s112
    %p121 = scmp.eq.s32.totalorder %s17, 0
    %p122 = por %p120, %p121
    %p123 = scmp.ne.s32.totalorder %s111, %s112
    %p124 = scmp.eq.s32.totalorder %s18, 1
    %p125 = por %p123, %p124
    %p127 = scmp.ne.s32.totalorder %s112, %s126
    %p128 = scmp.eq.s32.totalorder %s18, 0
    %p129 = por %p127, %p128
    %s131 = sadd.s32 %s130, 1
    %p134 = scmp.eq.s32.totalorder %s12, 1
    %p135 = scmp.ne.s32.totalorder %s130, %s132
    %p136 = scmp.eq.s32.totalorder %s12, 0
    %p137 = por %p135, %p136
    %p138 = scmp.ne.s32.totalorder %s130, %s132
    %p139 = scmp.eq.s32.totalorder %s17, 1
    %p140 = por %p138, %p139
    %p141 = scmp.ne.s32.totalorder %s132, %s133
    %p142 = scmp.eq.s32.totalorder %s17, 0
    %p143 = por %p141, %p142
    %p144 = scmp.ne.s32.totalorder %s132, %s133
    %p145 = scmp.eq.s32.totalorder %s18, 1
    %p146 = por %p144, %p145
    %p148 = scmp.ne.s32.totalorder %s133, %s147
    %p149 = scmp.eq.s32.totalorder %s18, 0
    %p150 = por %p148, %p149
    %s151 = ssub.s32 %s12, %s19
    %p152 = scmp.eq.s32.totalorder %s151, 0
    %s154 = sadd.s32 %s153, 1
    %s155 = scalar_select %p152, %s153, %s154
    %p158 = pneg %p152
    %p159 = scmp.eq.s32.totalorder %s12, 1
    %p160 = por %p158, %p159
    %p161 = scmp.ne.s32.totalorder %s153, %s156
    %p162 = scmp.eq.s32.totalorder %s12, 0
    %p163 = por %p161, %p162
    %p164 = scmp.ne.s32.totalorder %s153, %s156
    %p165 = scmp.eq.s32.totalorder %s17, 1
    %p166 = por %p164, %p165
    %p167 = scmp.ne.s32.totalorder %s156, %s157
    %p168 = scmp.eq.s32.totalorder %s17, 0
    %p169 = por %p167, %p168
    %p170 = scmp.ne.s32.totalorder %s156, %s157
    %p171 = scmp.eq.s32.totalorder %s18, 1
    %p172 = por %p170, %p171
    %p174 = scmp.ne.s32.totalorder %s157, %s173
    %p175 = scmp.eq.s32.totalorder %s18, 0
    %p176 = por %p174, %p175
    %p177 = scmp.le.s32.totalorder 1, %s12
    %p178 = scmp.lt.s32.totalorder %s12, 3
    %p179 = pnand %p177, %p178
    %p180 = pneg %p179
    // Predicated region
    $region9: #{_forward_impl.1} parent=5 // pred_check
      _
    $region10: #{_forward_impl.1} parent=5 // pred_check_branch
      %182 = sbr.rel (%p179) target = $region12
    $region11: #{_forward_impl.1} parent=5 // pred_region
      %s183 = ssub.s32 %s12, 1
      // Predicated region
      $region13: #{_forward_impl.1} parent=11 // pred_check
        %p184 = pneg %p59
      $region14: #{_forward_impl.1} parent=11 // pred_check_branch
        %186 = sbr.rel (%p184) target = $region16
      $region15: #{_forward_impl.1} parent=11 // pred_region
        _
      $region16: #{_forward_impl.1} parent=11 // pred_fallthru
        _
      // Predicated region
      $region17: #{_forward_impl.1} parent=11 // pred_check
        %p187 = pneg %p80
      $region18: #{_forward_impl.1} parent=11 // pred_check_branch
        %189 = sbr.rel (%p187) target = $region20
      $region19: #{_forward_impl.1} parent=11 // pred_region
        _
      $region20: #{_forward_impl.1} parent=11 // pred_fallthru
        _
      // Predicated region
      $region21: #{_forward_impl.1} parent=11 // pred_check
        %p190 = pneg %p101
      $region22: #{_forward_impl.1} parent=11 // pred_check_branch
        %192 = sbr.rel (%p190) target = $region24
      $region23: #{_forward_impl.1} parent=11 // pred_region
        _
      $region24: #{_forward_impl.1} parent=11 // pred_fallthru
        _
      // Predicated region
      $region25: #{_forward_impl.1} parent=11 // pred_check
        %p193 = pneg %p122
      $region26: #{_forward_impl.1} parent=11 // pred_check_branch
        %195 = sbr.rel (%p193) target = $region28
      $region27: #{_forward_impl.1} parent=11 // pred_region
        _
      $region28: #{_forward_impl.1} parent=11 // pred_fallthru
        _
      // Predicated region
      $region29: #{_forward_impl.1} parent=11 // pred_check
        %p196 = pneg %p143
      $region30: #{_forward_impl.1} parent=11 // pred_check_branch
        %198 = sbr.rel (%p196) target = $region32
      $region31: #{_forward_impl.1} parent=11 // pred_region
        _
      $region32: #{_forward_impl.1} parent=11 // pred_fallthru
        _
    $region12: #{_forward_impl.1} parent=5 // pred_fallthru
      _
    %p199 = scmp.lt.s32.totalorder %s12, 2
    // Predicated region
    $region33: #{_forward_impl.1} parent=5 // pred_check
      %p200 = pneg %p199
    $region34: #{_forward_impl.1} parent=5 // pred_check_branch
      %202 = sbr.rel (%p200) target = $region36
    $region35: #{_forward_impl.1} parent=5 // pred_region
      // Predicated region
      $region37: #{_forward_impl.1} parent=35 // pred_check
        %p203 = pneg %p32
      $region38: #{_forward_impl.1} parent=35 // pred_check_branch
        %205 = sbr.rel (%p203) target = $region40
      $region39: #{_forward_impl.1} parent=35 // pred_region
        %p206 = scmp.lt.s32.totalorder %s12, 1
        %s207 = scalar_select %p206, %s12, 1
        %s208 = smul.addr %s207, 4
        %s209 = smul.addr %s208, 8
        %s210 = scalar_lea.vmem %s0, %s209
      $region40: #{_forward_impl.1} parent=35 // pred_fallthru
        _
    $region36: #{_forward_impl.1} parent=5 // pred_fallthru
      _
    %p211 = scmp.le.s32.totalorder 1, %s12
    %p212 = scmp.lt.s32.totalorder %s12, 3
    %p213 = pnand %p211, %p212
    %p214 = pneg %p213
    // Predicated region
    $region41: #{_forward_impl.1} parent=5 // pred_check
      _
    $region42: #{_forward_impl.1} parent=5 // pred_check_branch
      %216 = sbr.rel (%p213) target = $region44
    $region43: #{_forward_impl.1} parent=5 // pred_region
      %s217 = ssub.s32 %s12, 1
      %p218 = scmp.lt.s32.totalorder %s17, 1
      %s219 = scalar_select %p218, %s17, 1
      %s220 = smul.addr %s219, 4
      %s221 = smul.addr %s220, 8
      %s222 = scalar_lea.vmem %s0, %s221
      %p223 = pneg %p38
      %p224 = pneg %p35
      %p225 = pneg %p59
      %p226 = pneg %p56
      %p227 = pneg %p80
      %p228 = pneg %p77
      %p229 = pneg %p101
      %p230 = pneg %p98
      %p231 = pneg %p122
      %p232 = pneg %p119
      %p233 = pneg %p143
      %p234 = pneg %p140
      %p235 = pneg %p169
      %p236 = pneg %p166
      %p237 = scmp.lt.s32.totalorder %s17, 1
      %s238 = scalar_select %p237, %s17, 1
      %s239 = smul.addr %s238, 2
      %s240 = smul.addr %s239, 8
      %s241 = scalar_lea.vmem %s6, %s240
      %p242 = scmp.lt.s32.totalorder %s17, 1
      %s243 = scalar_select %p242, %s17, 1
      %s244 = smul.addr %s243, 4
      %s245 = smul.addr %s244, 8
      %s246 = scalar_lea.vmem %s0, %s245
      %p247 = scmp.lt.s32.totalorder %s17, 1
      %s248 = scalar_select %p247, %s17, 1
      %s249 = smul.addr %s248, 2
      %s250 = smul.addr %s249, 8
      %s251 = scalar_lea.vmem %s6, %s250
      %v253 = vld [vmem:[%s246] sm:$0xff]
      %v254 = vld [vmem:[%s246 + $0x8] sm:$0xff]
      %v255 = vld [vmem:[%s246 + $0x10] sm:$0xff]
      %v256 = vld [vmem:[%s246 + $0x18] sm:$0xff]
      %261 = vrot.lane.b32.xlu0 %v253, 17
      %v262 = vpop.permute.xlu0 %261
      %263 = vrot.lane.b32.xlu0 %v254, 17
      %v264 = vpop.permute.xlu0 %263
      %265 = vrot.lane.b32.xlu0 %v255, 17
      %v266 = vpop.permute.xlu0 %265
      %267 = vrot.lane.b32.xlu0 %v256, 17
      %v268 = vpop.permute.xlu0 %267
      %vm269 = vcmask 138240
      %v270 = vsel %vm269, %v262, %v264
      %v271 = vsel %vm269, %v266, %v268
      %v278 = vsel %vm269, 0.0, %v262
      %v279 = vsel %vm269, 0.0, %v266
      %v280 = vsel %vm269, %v264, 0.0
      %v281 = vsel %vm269, %v268, 0.0
      %v282 = vld [vmem:[%s1] ss:$4 sm:$0x7]
      %v284 = vlaneseq
      %v285 = vshrl.u32 %v284, 7
      %v286 = vsub.s32 0, %v285
      %v287 = vrot.slane %v282, %v286
      %v288 = vlaneseq
      %v289 = vshrl.u32 %v288, 7
      %v290 = vsub.s32 1, %v289
      %v291 = vrot.slane %v282, %v290
      %v292 = vlaneseq
      %v293 = vshrl.u32 %v292, 7
      %v294 = vsub.s32 2, %v293
      %v295 = vrot.slane %v282, %v294
      %v299 = vmul.f32 %v278, %v287
      %v300 = vmul.f32 %v270, %v291
      %v301 = vmul.f32 %v280, %v295
      %v302 = vmul.f32 %v279, %v287
      %v303 = vmul.f32 %v271, %v291
      %v304 = vmul.f32 %v281, %v295
      %s305 = scalar_lea.vmem %s1, 1
      %v306 = vld [vmem:[%s305] ss:$4 sm:$0x7]
      %v308 = vlaneseq
      %v309 = vshrl.u32 %v308, 7
      %v310 = vsub.s32 0, %v309
      %v311 = vrot.slane %v306, %v310
      %v312 = vlaneseq
      %v313 = vshrl.u32 %v312, 7
      %v314 = vsub.s32 1, %v313
      %v315 = vrot.slane %v306, %v314
      %v316 = vlaneseq
      %v317 = vshrl.u32 %v316, 7
      %v318 = vsub.s32 2, %v317
      %v319 = vrot.slane %v306, %v318
      %v323 = vmul.f32 %v278, %v311
      %v324 = vmul.f32 %v270, %v315
      %v325 = vmul.f32 %v280, %v319
      %v326 = vmul.f32 %v279, %v311
      %v327 = vmul.f32 %v271, %v315
      %v328 = vmul.f32 %v281, %v319
      %s329 = scalar_lea.vmem %s1, 2
      %v330 = vld [vmem:[%s329] ss:$4 sm:$0x7]
      %v332 = vlaneseq
      %v333 = vshrl.u32 %v332, 7
      %v334 = vsub.s32 0, %v333
      %v335 = vrot.slane %v330, %v334
      %v336 = vlaneseq
      %v337 = vshrl.u32 %v336, 7
      %v338 = vsub.s32 1, %v337
      %v339 = vrot.slane %v330, %v338
      %v340 = vlaneseq
      %v341 = vshrl.u32 %v340, 7
      %v342 = vsub.s32 2, %v341
      %v343 = vrot.slane %v330, %v342
      %v347 = vmul.f32 %v278, %v335
      %v348 = vmul.f32 %v270, %v339
      %v349 = vmul.f32 %v280, %v343
      %v350 = vmul.f32 %v279, %v335
      %v351 = vmul.f32 %v271, %v339
      %v352 = vmul.f32 %v281, %v343
      %359 = vrot.lane.b32.xlu0 %v323, 127
      %v360 = vpop.permute.xlu0 %359
      %361 = vrot.lane.b32.xlu0 %v324, 127
      %v362 = vpop.permute.xlu0 %361
      %363 = vrot.lane.b32.xlu0 %v325, 127
      %v364 = vpop.permute.xlu0 %363
      %365 = vrot.lane.b32.xlu0 %v326, 127
      %v366 = vpop.permute.xlu0 %365
      %367 = vrot.lane.b32.xlu0 %v327, 127
      %v368 = vpop.permute.xlu0 %367
      %369 = vrot.lane.b32.xlu0 %v328, 127
      %v370 = vpop.permute.xlu0 %369
      %vm371 = vcmask 1039360
      %v372 = vsel %vm371, %v360, %v362
      %v373 = vsel %vm371, %v362, %v364
      %v374 = vsel %vm371, %v366, %v368
      %v375 = vsel %vm371, %v368, %v370
      %386 = vrot.lane.b32.xlu0 %v347, 126
      %v387 = vpop.permute.xlu0 %386
      %388 = vrot.lane.b32.xlu0 %v348, 126
      %v389 = vpop.permute.xlu0 %388
      %390 = vrot.lane.b32.xlu0 %v349, 126
      %v391 = vpop.permute.xlu0 %390
      %392 = vrot.lane.b32.xlu0 %v350, 126
      %v393 = vpop.permute.xlu0 %392
      %394 = vrot.lane.b32.xlu0 %v351, 126
      %v395 = vpop.permute.xlu0 %394
      %396 = vrot.lane.b32.xlu0 %v352, 126
      %v397 = vpop.permute.xlu0 %396
      %vm398 = vcmask 1031168
      %v399 = vsel %vm398, %v387, %v389
      %v400 = vsel %vm398, %v389, %v391
      %v401 = vsel %vm398, %v393, %v395
      %v402 = vsel %vm398, %v395, %v397
      %413 = vrot.lane.b32.xlu0 %v299, 112
      %v414 = vpop.permute.xlu0 %413
      %415 = vrot.lane.b32.xlu0 %v300, 112
      %v416 = vpop.permute.xlu0 %415
      %417 = vrot.lane.b32.xlu0 %v301, 112
      %v418 = vpop.permute.xlu0 %417
      %419 = vrot.lane.b32.xlu0 %v302, 112
      %v420 = vpop.permute.xlu0 %419
      %421 = vrot.lane.b32.xlu0 %v303, 112
      %v422 = vpop.permute.xlu0 %421
      %423 = vrot.lane.b32.xlu0 %v304, 112
      %v424 = vpop.permute.xlu0 %423
      %vm425 = vcmask 916480
      %v426 = vsel %vm425, %v414, %v416
      %v427 = vsel %vm425, %v416, %v418
      %v428 = vsel %vm425, %v420, %v422
      %v429 = vsel %vm425, %v422, %v424
      %434 = vrot.lane.b32.xlu0 %v323, 111
      %v435 = vpop.permute.xlu0 %434
      %436 = vrot.lane.b32.xlu0 %v324, 111
      %v437 = vpop.permute.xlu0 %436
      %438 = vrot.lane.b32.xlu0 %v325, 111
      %v439 = vpop.permute.xlu0 %438
      %440 = vrot.lane.b32.xlu0 %v326, 111
      %v441 = vpop.permute.xlu0 %440
      %442 = vrot.lane.b32.xlu0 %v327, 111
      %v443 = vpop.permute.xlu0 %442
      %444 = vrot.lane.b32.xlu0 %v328, 111
      %v445 = vpop.permute.xlu0 %444
      %vm446 = vcmask 908288
      %v447 = vsel %vm446, %v435, %v437
      %v448 = vsel %vm446, %v437, %v439
      %v449 = vsel %vm446, %v441, %v443
      %v450 = vsel %vm446, %v443, %v445
      %455 = vrot.lane.b32.xlu0 %v347, 110
      %v456 = vpop.permute.xlu0 %455
      %457 = vrot.lane.b32.xlu0 %v348, 110
      %v458 = vpop.permute.xlu0 %457
      %459 = vrot.lane.b32.xlu0 %v349, 110
      %v460 = vpop.permute.xlu0 %459
      %461 = vrot.lane.b32.xlu0 %v350, 110
      %v462 = vpop.permute.xlu0 %461
      %463 = vrot.lane.b32.xlu0 %v351, 110
      %v464 = vpop.permute.xlu0 %463
      %465 = vrot.lane.b32.xlu0 %v352, 110
      %v466 = vpop.permute.xlu0 %465
      %vm467 = vcmask 900096
      %v468 = vsel %vm467, %v456, %v458
      %v469 = vsel %vm467, %v458, %v460
      %v470 = vsel %vm467, %v462, %v464
      %v471 = vsel %vm467, %v464, %v466
      %476 = vrot.lane.b32.xlu0 %v299, 96
      %v477 = vpop.permute.xlu0 %476
      %478 = vrot.lane.b32.xlu0 %v300, 96
      %v479 = vpop.permute.xlu0 %478
      %480 = vrot.lane.b32.xlu0 %v301, 96
      %v481 = vpop.permute.xlu0 %480
      %482 = vrot.lane.b32.xlu0 %v302, 96
      %v483 = vpop.permute.xlu0 %482
      %484 = vrot.lane.b32.xlu0 %v303, 96
      %v485 = vpop.permute.xlu0 %484
      %486 = vrot.lane.b32.xlu0 %v304, 96
      %v487 = vpop.permute.xlu0 %486
      %vm488 = vcmask 785408
      %v489 = vsel %vm488, %v477, %v479
      %v490 = vsel %vm488, %v479, %v481
      %v491 = vsel %vm488, %v483, %v485
      %v492 = vsel %vm488, %v485, %v487
      %497 = vrot.lane.b32.xlu0 %v323, 95
      %v498 = vpop.permute.xlu0 %497
      %499 = vrot.lane.b32.xlu0 %v324, 95
      %v500 = vpop.permute.xlu0 %499
      %501 = vrot.lane.b32.xlu0 %v325, 95
      %v502 = vpop.permute.xlu0 %501
      %503 = vrot.lane.b32.xlu0 %v326, 95
      %v504 = vpop.permute.xlu0 %503
      %505 = vrot.lane.b32.xlu0 %v327, 95
      %v506 = vpop.permute.xlu0 %505
      %507 = vrot.lane.b32.xlu0 %v328, 95
      %v508 = vpop.permute.xlu0 %507
      %vm509 = vcmask 777216
      %v510 = vsel %vm509, %v498, %v500
      %v511 = vsel %vm509, %v500, %v502
      %v512 = vsel %vm509, %v504, %v506
      %v513 = vsel %vm509, %v506, %v508
      %518 = vrot.lane.b32.xlu0 %v347, 94
      %v519 = vpop.permute.xlu0 %518
      %520 = vrot.lane.b32.xlu0 %v348, 94
      %v521 = vpop.permute.xlu0 %520
      %522 = vrot.lane.b32.xlu0 %v349, 94
      %v523 = vpop.permute.xlu0 %522
      %524 = vrot.lane.b32.xlu0 %v350, 94
      %v525 = vpop.permute.xlu0 %524
      %526 = vrot.lane.b32.xlu0 %v351, 94
      %v527 = vpop.permute.xlu0 %526
      %528 = vrot.lane.b32.xlu0 %v352, 94
      %v529 = vpop.permute.xlu0 %528
      %vm530 = vcmask 769024
      %v531 = vsel %vm530, %v519, %v521
      %v532 = vsel %vm530, %v521, %v523
      %v533 = vsel %vm530, %v525, %v527
      %v534 = vsel %vm530, %v527, %v529
      %v539 = vpack.c.bf16 %v302, %v299
      %v540 = vpack.c.bf16 %v303, %v300
      %v541 = vpack.c.bf16 %v374, %v372
      %v542 = vpack.c.bf16 %v375, %v373
      %v543 = vpack.c.bf16 %v401, %v399
      %v544 = vpack.c.bf16 %v402, %v400
      %v545 = vpack.c.bf16 %v428, %v426
      %v546 = vpack.c.bf16 %v429, %v427
      %v547 = vpack.c.bf16 %v449, %v447
      %v548 = vpack.c.bf16 %v450, %v448
      %v549 = vpack.c.bf16 %v470, %v468
      %v550 = vpack.c.bf16 %v471, %v469
      %v551 = vpack.c.bf16 %v491, %v489
      %v552 = vpack.c.bf16 %v492, %v490
      %v553 = vpack.c.bf16 %v512, %v510
      %v554 = vpack.c.bf16 %v513, %v511
      %v555 = vpack.c.bf16 %v533, %v531
      %v556 = vpack.c.bf16 %v534, %v532
      %v557 = vld [vmem:[%s2] sm:$0xff]
      %v558 = vld [vmem:[%s2 + $0x8] sm:$0xff]
      %v559 = vld [vmem:[%s2 + $0x10] sm:$0xff]
      %v560 = vld [vmem:[%s2 + $0x18] sm:$0xff]
      %v561 = vld [vmem:[%s2 + $0x20] sm:$0xff]
      %v562 = vld [vmem:[%s2 + $0x28] sm:$0xff]
      %v563 = vld [vmem:[%s2 + $0x30] sm:$0xff]
      %v564 = vld [vmem:[%s2 + $0x38] sm:$0xff]
      %v565 = vld [vmem:[%s2 + $0x40] sm:$0xff]
      %v566 = vld [vmem:[%s2 + $0x48] sm:$0xff]
      %v567 = vld [vmem:[%s2 + $0x50] sm:$0xff]
      %v568 = vld [vmem:[%s2 + $0x58] sm:$0xff]
      %v569 = vld [vmem:[%s2 + $0x60] sm:$0xff]
      %v570 = vld [vmem:[%s2 + $0x68] sm:$0xff]
      %v571 = vld [vmem:[%s2 + $0x70] sm:$0xff]
      %v572 = vld [vmem:[%s2 + $0x78] sm:$0xff]
      %v573 = vld [vmem:[%s3] sm:$0xff]
      %v574 = vld [vmem:[%s3 + $0x8] sm:$0xff]
      %v575 = vld [vmem:[%s3 + $0x10] sm:$0xff]
      %v576 = vld [vmem:[%s3 + $0x18] sm:$0xff]
      %v577 = vld [vmem:[%s3 + $0x20] sm:$0xff]
      %v578 = vld [vmem:[%s3 + $0x28] sm:$0xff]
      %v579 = vld [vmem:[%s3 + $0x30] sm:$0xff]
      %v580 = vld [vmem:[%s3 + $0x38] sm:$0xff]
      %v581 = vld [vmem:[%s3 + $0x40] sm:$0xff]
      %v582 = vld [vmem:[%s3 + $0x48] sm:$0xff]
      %v583 = vld [vmem:[%s3 + $0x50] sm:$0xff]
      %v584 = vld [vmem:[%s3 + $0x58] sm:$0xff]
      %v585 = vld [vmem:[%s3 + $0x60] sm:$0xff]
      %v586 = vld [vmem:[%s3 + $0x68] sm:$0xff]
      %v587 = vld [vmem:[%s3 + $0x70] sm:$0xff]
      %v588 = vld [vmem:[%s3 + $0x78] sm:$0xff]
      %590 = vset.pattern.permute.xlu0 0
      %591 = vperm.xlu0 %590, %v573
      %v592 = vpop.permute.xlu0 %591
      %595 = vset.pattern.permute.xlu0 0
      %596 = vperm.xlu0 %595, %v574
      %v597 = vpop.permute.xlu0 %596
      %600 = vset.pattern.permute.xlu0 0
      %601 = vperm.xlu0 %600, %v575
      %v602 = vpop.permute.xlu0 %601
      %605 = vset.pattern.permute.xlu0 0
      %606 = vperm.xlu0 %605, %v576
      %v607 = vpop.permute.xlu0 %606
      %610 = vset.pattern.permute.xlu0 0
      %611 = vperm.xlu0 %610, %v577
      %v612 = vpop.permute.xlu0 %611
      %615 = vset.pattern.permute.xlu0 0
      %616 = vperm.xlu0 %615, %v578
      %v617 = vpop.permute.xlu0 %616
      %620 = vset.pattern.permute.xlu0 0
      %621 = vperm.xlu0 %620, %v579
      %v622 = vpop.permute.xlu0 %621
      %625 = vset.pattern.permute.xlu0 0
      %626 = vperm.xlu0 %625, %v580
      %v627 = vpop.permute.xlu0 %626
      %630 = vset.pattern.permute.xlu0 0
      %631 = vperm.xlu0 %630, %v581
      %v632 = vpop.permute.xlu0 %631
      %635 = vset.pattern.permute.xlu0 0
      %636 = vperm.xlu0 %635, %v582
      %v637 = vpop.permute.xlu0 %636
      %640 = vset.pattern.permute.xlu0 0
      %641 = vperm.xlu0 %640, %v583
      %v642 = vpop.permute.xlu0 %641
      %645 = vset.pattern.permute.xlu0 0
      %646 = vperm.xlu0 %645, %v584
      %v647 = vpop.permute.xlu0 %646
      %650 = vset.pattern.permute.xlu0 0
      %651 = vperm.xlu0 %650, %v585
      %v652 = vpop.permute.xlu0 %651
      %655 = vset.pattern.permute.xlu0 0
      %656 = vperm.xlu0 %655, %v586
      %v657 = vpop.permute.xlu0 %656
      %660 = vset.pattern.permute.xlu0 0
      %661 = vperm.xlu0 %660, %v587
      %v662 = vpop.permute.xlu0 %661
      %665 = vset.pattern.permute.xlu0 0
      %666 = vperm.xlu0 %665, %v588
      %v667 = vpop.permute.xlu0 %666
      %v685 = vunpack.c.l.b16 %v557
      %v686 = vunpack.c.h.b16 %v557
      %v687 = vunpack.c.l.b16 %v558
      %v688 = vunpack.c.h.b16 %v558
      %v689 = vunpack.c.l.b16 %v559
      %v690 = vunpack.c.h.b16 %v559
      %v691 = vunpack.c.l.b16 %v560
      %v692 = vunpack.c.h.b16 %v560
      %v693 = vunpack.c.l.b16 %v561
      %v694 = vunpack.c.h.b16 %v561
      %v695 = vunpack.c.l.b16 %v562
      %v696 = vunpack.c.h.b16 %v562
      %v697 = vunpack.c.l.b16 %v563
      %v698 = vunpack.c.h.b16 %v563
      %v699 = vunpack.c.l.b16 %v564
      %v700 = vunpack.c.h.b16 %v564
      %v701 = vunpack.c.l.b16 %v565
      %v702 = vunpack.c.h.b16 %v565
      %v703 = vunpack.c.l.b16 %v566
      %v704 = vunpack.c.h.b16 %v566
      %v705 = vunpack.c.l.b16 %v567
      %v706 = vunpack.c.h.b16 %v567
      %v707 = vunpack.c.l.b16 %v568
      %v708 = vunpack.c.h.b16 %v568
      %v709 = vunpack.c.l.b16 %v569
      %v710 = vunpack.c.h.b16 %v569
      %v711 = vunpack.c.l.b16 %v570
      %v712 = vunpack.c.h.b16 %v570
      %v713 = vunpack.c.l.b16 %v571
      %v714 = vunpack.c.h.b16 %v571
      %v715 = vunpack.c.l.b16 %v572
      %v716 = vunpack.c.h.b16 %v572
      %v717 = vpack.c.b16 %v687, %v685
      %v718 = vpack.c.b16 %v688, %v686
      %v719 = vpack.c.b16 %v691, %v689
      %v720 = vpack.c.b16 %v692, %v690
      %v721 = vpack.c.b16 %v695, %v693
      %v722 = vpack.c.b16 %v696, %v694
      %v723 = vpack.c.b16 %v699, %v697
      %v724 = vpack.c.b16 %v700, %v698
      %v725 = vpack.c.b16 %v703, %v701
      %v726 = vpack.c.b16 %v704, %v702
      %v727 = vpack.c.b16 %v707, %v705
      %v728 = vpack.c.b16 %v708, %v706
      %v729 = vpack.c.b16 %v711, %v709
      %v730 = vpack.c.b16 %v712, %v710
      %v731 = vpack.c.b16 %v715, %v713
      %v732 = vpack.c.b16 %v716, %v714
      %vm741 = vcmask 130048
      %v743 = vsel %vm741, %v718, 0
      %v746 = vsel %vm741, %v720, 0
      %v749 = vsel %vm741, %v722, 0
      %v752 = vsel %vm741, %v724, 0
      %v755 = vsel %vm741, %v726, 0
      %v758 = vsel %vm741, %v728, 0
      %v761 = vsel %vm741, %v730, 0
      %v764 = vsel %vm741, %v732, 0
      %766 = vmatprep.subr.bf16.mxu0 %v540
      %767 = vmatpush1.bf16.msra.mxu0 %v539
      %768 = vmatprep.subr.bf16.mxu0 %v542
      %769 = vmatpush1.bf16.msra.mxu0 %v541
      %770 = vmatprep.subr.bf16.mxu0 %v544
      %771 = vmatpush1.bf16.msra.mxu0 %v543
      %772 = vmatprep.subr.bf16.mxu0 %v546
      %773 = vmatpush1.bf16.msra.mxu0 %v545
      %774 = vmatprep.subr.bf16.mxu0 %v548
      %775 = vmatpush1.bf16.msra.mxu0 %v547
      %776 = vmatprep.subr.bf16.mxu0 %v550
      %777 = vmatpush1.bf16.msra.mxu0 %v549
      %778 = vmatprep.subr.bf16.mxu0 %v552
      %779 = vmatpush1.bf16.msra.mxu0 %v551
      %780 = vmatprep.subr.bf16.mxu0 %v554
      %781 = vmatpush1.bf16.msra.mxu0 %v553
      %782 = vmatprep.subr.bf16.mxu0 %v556
      %783 = vmatpush1.bf16.msra.mxu0 %v555
      %784 = vmatprep.subr.bf16.mxu0 0
      %785 = vmatpush1.bf16.msra.mxu0 0
      %786 = vmatprep.subr.bf16.mxu0 0
      %787 = vmatpush1.bf16.msra.mxu0 0
      %788 = vmatprep.subr.bf16.mxu0 0
      %789 = vmatpush1.bf16.msra.mxu0 0
      %790 = vmatprep.subr.bf16.mxu0 0
      %791 = vmatpush1.bf16.msra.mxu0 0
      %792 = vmatprep.subr.bf16.mxu0 0
      %793 = vmatpush1.bf16.msra.mxu0 0
      %794 = vmatprep.subr.bf16.mxu0 0
      %795 = vmatpush1.bf16.msra.mxu0 0
      %796 = vmatprep.subr.bf16.mxu0 0
      %797 = vmatpush1.bf16.msra.mxu0 0
      %798 = vmatprep.mubr.bf16.mxu0 %v743
      %799 = vmatmul.mubr.bf16.gmra.mrb[0].mxu0 %v717
      %v800 = vpop.f32.mrb[0].mxu0
      %v801 = vadd.f32 %v592, %v800
      %v802 = vpop.f32.mrb[0].mxu0
      %v803 = vadd.f32 %v592, %v802
      %v804 = vpop.f32.mrb[0].mxu0
      %v805 = vadd.f32 %v597, %v804
      %v806 = vpop.f32.mrb[0].mxu0
      %v807 = vadd.f32 %v597, %v806
      %808 = vmatprep.mubr.bf16.mxu0 %v746
      %809 = vmatmul.mubr.bf16.gmra.mrb[0].mxu0 %v719
      %v810 = vpop.f32.mrb[0].mxu0
      %v811 = vadd.f32 %v602, %v810
      %v812 = vpop.f32.mrb[0].mxu0
      %v813 = vadd.f32 %v602, %v812
      %v814 = vpop.f32.mrb[0].mxu0
      %v815 = vadd.f32 %v607, %v814
      %v816 = vpop.f32.mrb[0].mxu0
      %v817 = vadd.f32 %v607, %v816
      %818 = vmatprep.mubr.bf16.mxu0 %v749
      %819 = vmatmul.mubr.bf16.gmra.mrb[0].mxu0 %v721
      %v820 = vpop.f32.mrb[0].mxu0
      %v821 = vadd.f32 %v612, %v820
      %v822 = vpop.f32.mrb[0].mxu0
      %v823 = vadd.f32 %v612, %v822
      %v824 = vpop.f32.mrb[0].mxu0
      %v825 = vadd.f32 %v617, %v824
      %v826 = vpop.f32.mrb[0].mxu0
      %v827 = vadd.f32 %v617, %v826
      %828 = vmatprep.mubr.bf16.mxu0 %v752
      %829 = vmatmul.mubr.bf16.gmra.mrb[0].mxu0 %v723
      %v830 = vpop.f32.mrb[0].mxu0
      %v831 = vadd.f32 %v622, %v830
      %v832 = vpop.f32.mrb[0].mxu0
      %v833 = vadd.f32 %v622, %v832
      %v834 = vpop.f32.mrb[0].mxu0
      %v835 = vadd.f32 %v627, %v834
      %v836 = vpop.f32.mrb[0].mxu0
      %v837 = vadd.f32 %v627, %v836
      %838 = vmatprep.mubr.bf16.mxu0 %v755
      %839 = vmatmul.mubr.bf16.gmra.mrb[0].mxu0 %v725
      %v840 = vpop.f32.mrb[0].mxu0
      %v841 = vadd.f32 %v632, %v840
      %v842 = vpop.f32.mrb[0].mxu0
      %v843 = vadd.f32 %v632, %v842
      %v844 = vpop.f32.mrb[0].mxu0
      %v845 = vadd.f32 %v637, %v844
      %v846 = vpop.f32.mrb[0].mxu0
      %v847 = vadd.f32 %v637, %v846
      %848 = vmatprep.mubr.bf16.mxu0 %v758
      %849 = vmatmul.mubr.bf16.gmra.mrb[0].mxu0 %v727
      %v850 = vpop.f32.mrb[0].mxu0
      %v851 = vadd.f32 %v642, %v850
      %v852 = vpop.f32.mrb[0].mxu0
      %v853 = vadd.f32 %v642, %v852
      %v854 = vpop.f32.mrb[0].mxu0
      %v855 = vadd.f32 %v647, %v854
      %v856 = vpop.f32.mrb[0].mxu0
      %v857 = vadd.f32 %v647, %v856
      %858 = vmatprep.mubr.bf16.mxu0 %v761
      %859 = vmatmul.mubr.bf16.gmra.mrb[0].mxu0 %v729
      %v860 = vpop.f32.mrb[0].mxu0
      %v861 = vadd.f32 %v652, %v860
      %v862 = vpop.f32.mrb[0].mxu0
      %v863 = vadd.f32 %v652, %v862
      %v864 = vpop.f32.mrb[0].mxu0
      %v865 = vadd.f32 %v657, %v864
      %v866 = vpop.f32.mrb[0].mxu0
      %v867 = vadd.f32 %v657, %v866
      %868 = vmatprep.mubr.bf16.mxu0 %v764
      %869 = vmatmul.mubr.bf16.gmra.mrb[0].mxu0 %v731
      %v870 = vpop.f32.mrb[0].mxu0
      %v871 = vadd.f32 %v662, %v870
      %v872 = vpop.f32.mrb[0].mxu0
      %v873 = vadd.f32 %v662, %v872
      %v874 = vpop.f32.mrb[0].mxu0
      %v875 = vadd.f32 %v667, %v874
      %v876 = vpop.f32.mrb[0].mxu0
      %v877 = vadd.f32 %v667, %v876
      %878 = vdwg.mxu0
      %v879 = vmax.f32 %v801, 0.0
      %v880 = vmax.f32 %v803, 0.0
      %v881 = vmax.f32 %v805, 0.0
      %v882 = vmax.f32 %v807, 0.0
      %v883 = vmax.f32 %v811, 0.0
      %v884 = vmax.f32 %v813, 0.0
      %v885 = vmax.f32 %v815, 0.0
      %v886 = vmax.f32 %v817, 0.0
      %v887 = vmax.f32 %v821, 0.0
      %v888 = vmax.f32 %v823, 0.0
      %v889 = vmax.f32 %v825, 0.0
      %v890 = vmax.f32 %v827, 0.0
      %v891 = vmax.f32 %v831, 0.0
      %v892 = vmax.f32 %v833, 0.0
      %v893 = vmax.f32 %v835, 0.0
      %v894 = vmax.f32 %v837, 0.0
      %v895 = vmax.f32 %v841, 0.0
      %v896 = vmax.f32 %v843, 0.0
      %v897 = vmax.f32 %v845, 0.0
      %v898 = vmax.f32 %v847, 0.0
      %v899 = vmax.f32 %v851, 0.0
      %v900 = vmax.f32 %v853, 0.0
      %v901 = vmax.f32 %v855, 0.0
      %v902 = vmax.f32 %v857, 0.0
      %v903 = vmax.f32 %v861, 0.0
      %v904 = vmax.f32 %v863, 0.0
      %v905 = vmax.f32 %v865, 0.0
      %v906 = vmax.f32 %v867, 0.0
      %v907 = vmax.f32 %v871, 0.0
      %v908 = vmax.f32 %v873, 0.0
      %v909 = vmax.f32 %v875, 0.0
      %v910 = vmax.f32 %v877, 0.0
      %v911 = vld [vmem:[%s4] sm:$0xf]
      %v912 = vpack.c.bf16 %v881, %v879
      %v913 = vpack.c.bf16 %v882, %v880
      %v914 = vpack.c.bf16 %v885, %v883
      %v915 = vpack.c.bf16 %v886, %v884
      %v916 = vpack.c.bf16 %v889, %v887
      %v917 = vpack.c.bf16 %v890, %v888
      %v918 = vpack.c.bf16 %v893, %v891
      %v919 = vpack.c.bf16 %v894, %v892
      %v920 = vpack.c.bf16 %v897, %v895
      %v921 = vpack.c.bf16 %v898, %v896
      %v922 = vpack.c.bf16 %v901, %v899
      %v923 = vpack.c.bf16 %v902, %v900
      %v924 = vpack.c.bf16 %v905, %v903
      %v925 = vpack.c.bf16 %v906, %v904
      %v926 = vpack.c.bf16 %v909, %v907
      %v927 = vpack.c.bf16 %v910, %v908
      %v928 = vld [vmem:[%s5] sm:$0xff]
      %930 = vset.pattern.permute.xlu0 0
      %931 = vperm.xlu0 %930, %v928
      %v932 = vpop.permute.xlu0 %931
      %934 = vmatprep.subr.bf16.mxu0 %v913
      %935 = vmatpush1.bf16.msra.mxu0 %v912
      %936 = vmatprep.subr.bf16.mxu0 %v915
      %937 = vmatpush1.bf16.msra.mxu0 %v914
      %938 = vmatprep.subr.bf16.mxu0 %v917
      %939 = vmatpush1.bf16.msra.mxu0 %v916
      %940 = vmatprep.subr.bf16.mxu0 %v919
      %941 = vmatpush1.bf16.msra.mxu0 %v918
      %942 = vmatprep.subr.bf16.mxu0 %v921
      %943 = vmatpush1.bf16.msra.mxu0 %v920
      %944 = vmatprep.subr.bf16.mxu0 %v923
      %945 = vmatpush1.bf16.msra.mxu0 %v922
      %946 = vmatprep.subr.bf16.mxu0 %v925
      %947 = vmatpush1.bf16.msra.mxu0 %v924
      %948 = vmatprep.subr.bf16.mxu0 %v927
      %949 = vmatpush1.bf16.msra.mxu0 %v926
      %950 = vmatprep.subr.bf16.mxu0 0
      %951 = vmatpush1.bf16.msra.mxu0 0
      %952 = vmatprep.subr.bf16.mxu0 0
      %953 = vmatpush1.bf16.msra.mxu0 0
      %954 = vmatprep.subr.bf16.mxu0 0
      %955 = vmatpush1.bf16.msra.mxu0 0
      %956 = vmatprep.subr.bf16.mxu0 0
      %957 = vmatpush1.bf16.msra.mxu0 0
      %958 = vmatprep.subr.bf16.mxu0 0
      %959 = vmatpush1.bf16.msra.mxu0 0
      %960 = vmatprep.subr.bf16.mxu0 0
      %961 = vmatpush1.bf16.msra.mxu0 0
      %962 = vmatprep.subr.bf16.mxu0 0
      %963 = vmatpush1.bf16.msra.mxu0 0
      %964 = vmatprep.subr.bf16.mxu0 0
      %965 = vmatpush1.bf16.msra.mxu0 0
      %966 = vmatprep.mubr.bf16.mxu0 0
      %967 = vmatmul.mubr.bf16.gmra.mrb[0].mxu0 %v911
      %v968 = vpop.f32.mrb[0].mxu0
      %v969 = vadd.f32 %v932, %v968
      %v970 = vpop.f32.mrb[0].mxu0
      %v971 = vadd.f32 %v932, %v970
      %v972 = vpop.f32.mrb[0].mxu0
      %v973 = vpop.f32.mrb[0].mxu0
      %974 = vdwg.mxu0
      %975 = vst [vmem:[%s251] sm:$0xff] %v969
      %976 = vst [vmem:[%s251 + $0x8] sm:$0xff] %v971
      %p977 = scmp.lt.s32.totalorder %s17, 1
      %s978 = scalar_select %p977, %s17, 1
      %s979 = smul.addr %s978, 2
      %s980 = smul.addr %s979, 8
      %s981 = scalar_lea.vmem %s6, %s980
      // Predicated region
      $region45: #{_forward_impl.1} parent=43 // pred_check
        %p982 = pneg %p166
      $region46: #{_forward_impl.1} parent=43 // pred_check_branch
        %984 = sbr.rel (%p982) target = $region48
      $region47: #{_forward_impl.1} parent=43 // pred_region
        _
      $region48: #{_forward_impl.1} parent=43 // pred_fallthru
        _
    $region44: #{_forward_impl.1} parent=5 // pred_fallthru
      _
    %p985 = scmp.le.s32.totalorder 2, %s12
    // Predicated region
    $region49: #{_forward_impl.1} parent=5 // pred_check
      %p986 = pneg %p985
    $region50: #{_forward_impl.1} parent=5 // pred_check_branch
      %988 = sbr.rel (%p986) target = $region52
    $region51: #{_forward_impl.1} parent=5 // pred_region
      %s989 = ssub.s32 %s12, 2
      // Predicated region
      $region53: #{_forward_impl.1} parent=51 // pred_check
        %p990 = pneg %p172
      $region54: #{_forward_impl.1} parent=51 // pred_check_branch
        %992 = sbr.rel (%p990) target = $region56
      $region55: #{_forward_impl.1} parent=51 // pred_region
        %p993 = scmp.lt.s32.totalorder %s18, 1
        %s994 = scalar_select %p993, %s18, 1
        %s995 = smul.addr %s994, 2
        %s996 = smul.addr %s995, 8
        %s997 = scalar_lea.vmem %s6, %s996
      $region56: #{_forward_impl.1} parent=51 // pred_fallthru
        _
    $region52: #{_forward_impl.1} parent=5 // pred_fallthru
      _
  $region6: #{_forward_impl.1} parent=0 // loop_footer
    %s16 = sadd.s32 1, %s12
  $region7: #{_forward_impl.1} parent=0 // loop_footer_branch
    %11 = sbr.rel target = $region3
  $region8: #{_forward_impl.1} parent=0 // loop_exit
    _

</llo_original>
